<compile_context>
chip_gen: v7x
topology: tpu7x:2x2x1
jax: 0.10.0
libtpu: 0.0.40
codegen_flags: <defaults>
</compile_context>

<pallas_src>
import jax
import jax.numpy as jnp
from jax.experimental import pallas as pl
from jax.experimental.pallas import tpu as pltpu


def _vmem_capacity_bytes():
    try:
        return int(pltpu.get_tpu_info().vmem_capacity_bytes)
    except Exception:
        return 64 * 1024 * 1024          # conservative (v7x-sized) fallback


def _select_tiles(M, H, vmem_bytes):
    """Pick (TM, TN): lane-dense TN as large as fits ~70% of VMEM, grid_j >= 2."""
    TM = M if M <= 512 else 512
    TN = H                               # fallback: single full-width stripe
    if H % 128 == 0:
        for c in (2048, 1024, 512, 256, 128):
            if H % c != 0 or c > H // 2:            # keep grid_j >= 2 (v7x split)
                continue
            need = (2 * TM * H * 4                  # x row tile  (f32, dbl-buf)
                    + 2 * H * c * 2                 # weight stripe (bf16, dbl-buf)
                    + 2 * TM * c * 4                # output tile (f32, dbl-buf)
                    + 2 * c * 4)                    # bias stripe
            if need <= int(0.70 * vmem_bytes):
                TN = c
                break
    return TM, TN


def _make_kernel(TN, grid_j, j_axis):
    def kernel(x_ref, w_ref, b_ref, o_ref):
        # x_ref: (TM, H) f32   -- row tile; j-invariant => fetched once per row
        # w_ref: (H, TN) bf16  -- pre-transposed weight column stripe
        # b_ref: (1, TN) f32
        # o_ref: (TM, TN) f32
        h = jnp.dot(x_ref[...].astype(jnp.bfloat16), w_ref[...],
                    preferred_element_type=jnp.float32)
        h = h + b_ref[...]                          # broadcast (1, TN) over rows
        act = h * jax.nn.sigmoid(h)                 # SiLU in f32 (EUP sigmoid)
        if grid_j == 1:
            x_res = x_ref[...]                      # TN == H: whole row tile
        else:
            # TN is a multiple of 128 here -> pure VMEM lane offset, no shuffle.
            col = pl.multiple_of(pl.program_id(j_axis) * TN, 128)
            x_res = x_ref[:, pl.ds(col, TN)]
        o_ref[...] = (x_res + act).astype(o_ref.dtype)
    return kernel


def prepare_resblock_params(w, b):
    """One-time (init-time) prep: torch-style (H_out, H_in) weight -> W.T in
    bf16, bias -> (1, H) f32.  Reuse the result across every decode step."""
    w_t = jnp.asarray(w).T.astype(jnp.bfloat16)
    b2 = jnp.asarray(b).reshape(1, -1).astype(jnp.float32)
    return w_t, b2


def _resblock_2d(x2, w_t, b2):
    M, H = x2.shape
    vmem = _vmem_capacity_bytes()
    TM, TN = _select_tiles(M, H, vmem)
    grid_i = pl.cdiv(M, TM)
    grid_j = pl.cdiv(H, TN)

    x_rd = M * H * 4
    w_rd = H * H * 2
    o_wr = M * H * 4

    # Grid ordering: keep resident whichever operand is costlier to re-stream.
    if grid_i * w_rd + x_rd <= w_rd + grid_j * x_rd:
        grid = (grid_i, grid_j)                     # i outer: x row tile resident
        j_axis = 1
        x_map = lambda i, j: (i, 0)
        w_map = lambda i, j: (0, j)
        b_map = lambda i, j: (0, j)
        o_map = lambda i, j: (i, j)
        traffic = x_rd + grid_i * w_rd + o_wr + H * 4
    else:
        grid = (grid_j, grid_i)                     # j outer: weight stripe resident
        j_axis = 0
        x_map = lambda j, i: (i, 0)
        w_map = lambda j, i: (0, j)
        b_map = lambda j, i: (0, j)
        o_map = lambda j, i: (i, j)
        traffic = grid_j * x_rd + w_rd + o_wr + H * 4

    kernel = _make_kernel(TN, grid_j, j_axis)

    cost = pl.CostEstimate(
        flops=int(2 * M * H * H),
        transcendentals=int(M * H),
        bytes_accessed=int(traffic),
    )
    vmem_limit = min(100 * 1024 * 1024, int(0.8 * vmem))

    return pl.pallas_call(
        kernel,
        out_shape=jax.ShapeDtypeStruct((M, H), x2.dtype),
        grid_spec=pltpu.PrefetchScalarGridSpec(
            num_scalar_prefetch=0,
            grid=grid,
            in_specs=[
                pl.BlockSpec((TM, H), x_map),       # x row tile (MXU + residual)
                pl.BlockSpec((H, TN), w_map),       # weight column stripe (bf16)
                pl.BlockSpec((1, TN), b_map),       # bias stripe
            ],
            out_specs=pl.BlockSpec((TM, TN), o_map),
        ),
        compiler_params=pltpu.CompilerParams(
            dimension_semantics=("parallel", "parallel"),
            vmem_limit_bytes=vmem_limit,
        ),
        cost_estimate=cost,
    )(x2, w_t, b2)


@jax.jit
def resblock_apply(x, w_t_bf16, b2):
    """x: (..., H); w_t_bf16 = W.T in bf16, b2 = (1, H) f32 (both from
    prepare_resblock_params).  Returns x + SiLU(x @ W.T + b) in x's dtype."""
    H = x.shape[-1]
    x2 = x.reshape(-1, H)
    if x2.dtype != jnp.float32:
        x2 = x2.astype(jnp.float32)
    y2 = _resblock_2d(x2, w_t_bf16, b2)
    return y2.reshape(x.shape).astype(x.dtype)


if __name__ == "__main__":
    key = jax.random.PRNGKey(0)
    kx, kb, kw, kx2, kb2 = jax.random.split(key, 5)

    # --- Check 1: module exactly as initialized (zero weight, default bias
    #     init), hidden=32 -> single-stripe path, exact f32 reference.
    batch, seq, hidden = 2, 8, 32
    x = jax.random.normal(kx, (batch, seq, hidden), dtype=jnp.float32)
    w = jnp.zeros((hidden, hidden), dtype=jnp.float32)      # torch.nn.init.zeros_
    bound = 1.0 / (hidden ** 0.5)
    b = jax.random.uniform(kb, (hidden,), minval=-bound, maxval=bound,
                           dtype=jnp.float32)

    w_t, bias2d = prepare_resblock_params(w, b)             # hoisted, done once
    y = resblock_apply(x, w_t, bias2d)
    jax.block_until_ready(y)

    h_ref = x @ w.T + b
    y_ref = x + h_ref * jax.nn.sigmoid(h_ref)
    assert jnp.allclose(y, y_ref, atol=1e-5, rtol=1e-5), "mismatch (zero weight)"

    # --- Check 2: non-zero weight, hidden=256 -> grid_j = 2, exercising the
    #     column-striped weight, the aligned residual lane slice and the MXU
    #     path; reference uses the same bf16 operand quantization.
    hidden2 = 256
    x_b = jax.random.normal(kx2, (batch, seq, hidden2), dtype=jnp.float32)
    w_b = 0.05 * jax.random.normal(kw, (hidden2, hidden2), dtype=jnp.float32)
    bound2 = 1.0 / (hidden2 ** 0.5)
    b_b = jax.random.uniform(kb2, (hidden2,), minval=-bound2, maxval=bound2,
                             dtype=jnp.float32)

    w_b_t, bias2d_b = prepare_resblock_params(w_b, b_b)
    y_b = resblock_apply(x_b, w_b_t, bias2d_b)
    jax.block_until_ready(y_b)

    h_b = (jnp.dot(x_b.reshape(-1, hidden2).astype(jnp.bfloat16),
                   w_b.T.astype(jnp.bfloat16),
                   preferred_element_type=jnp.float32).reshape(x_b.shape) + b_b)
    y_b_ref = x_b + h_b * jax.nn.sigmoid(h_b)
    assert jnp.allclose(y_b, y_b_ref, atol=2e-3, rtol=2e-3), "mismatch (bf16 matmul)"

    print("KERNEL_OK")
</pallas_src>

<mosaic_0001>
module attributes {stable_mosaic.version = 11 : i64} {
  func.func @kernel(%arg0: i32, %arg1: i32, %arg2: memref<16x32xf32, #tpu.memory_space<vmem>>, %arg3: memref<32x32xbf16, #tpu.memory_space<vmem>>, %arg4: memref<1x32xf32, #tpu.memory_space<vmem>>, %arg5: memref<16x32xf32, #tpu.memory_space<vmem>>) attributes {dimension_semantics = [#tpu.dimension_semantics<parallel>, #tpu.dimension_semantics<parallel>], iteration_bounds = array<i64: 1, 1>, scalar_prefetch = 0 : i64, scratch_operands = 0 : i64, tpu.core_type = #tpu.core_type<tc>, window_params = [{transform_indices = @transform_0, window_bounds = array<i64: 16, 32>}, {transform_indices = @transform_1, window_bounds = array<i64: 32, 32>}, {transform_indices = @transform_2, window_bounds = array<i64: 1, 32>}, {transform_indices = @transform_3, window_bounds = array<i64: 16, 32>}]} {
    %c0 = arith.constant 0 : index
    %c0_0 = arith.constant 0 : index
    %0 = vector.load %arg2[%c0, %c0_0] : memref<16x32xf32, #tpu.memory_space<vmem>>, vector<16x32xf32>
    %1 = arith.truncf %0 : vector<16x32xf32> to vector<16x32xbf16>
    %c0_1 = arith.constant 0 : index
    %c0_2 = arith.constant 0 : index
    %2 = vector.load %arg3[%c0_1, %c0_2] : memref<32x32xbf16, #tpu.memory_space<vmem>>, vector<32x32xbf16>
    %cst = arith.constant dense<0.000000e+00> : vector<16x32xf32>
    %3 = tpu.matmul %1, %2, %cst {dimension_numbers = #tpu.dot_dimension_numbers<[1], [0], [0], [1], [0, 0, 1, 1], [], []>} : vector<16x32xbf16>, vector<32x32xbf16>, vector<16x32xf32> -> vector<16x32xf32>
    %c0_3 = arith.constant 0 : index
    %c0_4 = arith.constant 0 : index
    %4 = vector.load %arg4[%c0_3, %c0_4] : memref<1x32xf32, #tpu.memory_space<vmem>>, vector<1x32xf32>
    %5 = vector.broadcast %4 : vector<1x32xf32> to vector<16x32xf32>
    %6 = arith.addf %3, %5 : vector<16x32xf32>
    %7 = arith.negf %6 : vector<16x32xf32>
    %8 = math.exp %7 : vector<16x32xf32>
    %cst_5 = arith.constant 1.000000e+00 : f32
    %9 = vector.broadcast %cst_5 : f32 to vector<16x32xf32>
    %10 = arith.addf %9, %8 : vector<16x32xf32>
    %11 = arith.divf %9, %10 : vector<16x32xf32>
    %12 = arith.mulf %6, %11 : vector<16x32xf32>
    %c0_6 = arith.constant 0 : index
    %c0_7 = arith.constant 0 : index
    %13 = vector.load %arg2[%c0_6, %c0_7] : memref<16x32xf32, #tpu.memory_space<vmem>>, vector<16x32xf32>
    %14 = arith.addf %13, %12 : vector<16x32xf32>
    %c0_8 = arith.constant 0 : index
    %c0_9 = arith.constant 0 : index
    %15 = vector.load %arg5[%c0_8, %c0_9] : memref<16x32xf32, #tpu.memory_space<vmem>>, vector<16x32xf32>
    tpu.vector_store %arg5[%c0_8, %c0_9], %14 {strides = array<i32>} : memref<16x32xf32, #tpu.memory_space<vmem>>, vector<16x32xf32>,
    return
  }
  func.func @transform_0(%arg0: i32, %arg1: i32) -> (i32, i32) {
    %c0_i32 = arith.constant 0 : i32
    %c0_i32_0 = arith.constant 0 : i32
    return %arg0, %c0_i32 : i32, i32
  }
  func.func @transform_1(%arg0: i32, %arg1: i32) -> (i32, i32) {
    %c0_i32 = arith.constant 0 : i32
    %c0_i32_0 = arith.constant 0 : i32
    return %c0_i32, %arg1 : i32, i32
  }
  func.func @transform_2(%arg0: i32, %arg1: i32) -> (i32, i32) {
    %c0_i32 = arith.constant 0 : i32
    %c0_i32_0 = arith.constant 0 : i32
    return %c0_i32, %arg1 : i32, i32
  }
  func.func @transform_3(%arg0: i32, %arg1: i32) -> (i32, i32) {
    %c0_i32 = arith.constant 0 : i32
    return %arg0, %arg1 : i32, i32
  }
}

</mosaic_0001>

<llo_original>
// kernel: resblock_apply.1
$region0: #{resblock_apply.1}
  #allocation0 [shape = 'u32[]', space=smem, size = 0x4, offset = 0x4, fixed_abs, tag = 'smem constant byte address 0x4 - core index']
  #allocation1 [shape = 'u32[144,128]{1,0:T(1,128)}', space=vmem, size = 0x12000, scoped, tag = 'internal scratch']
  %s0 = inlined_call_operand.hbm [shape: f32[16,32], index: 0, kind: input, shape index: {}]
  %s1 = inlined_call_operand.hbm [shape: bf16[32,32], index: 1, kind: input, shape index: {}]
  %s2 = inlined_call_operand.vmem [shape: f32[1,32], index: 2, kind: input, shape index: {}]
  %s3 = inlined_call_operand.hbm [shape: f32[16,32], index: 3, kind: output, shape index: {}]
  %s4 = sld [smem:[#allocation0]]
  $region30: #{resblock_apply.1} parent=0
    _
  %s6 = ssub.s32 1, %s4
  %s7 = scalar_select 0, %s6, %s4
  $region1: #{resblock_apply.1} parent=0
    #allocation2 [shape = 'u8[8192]{0}', space=vmem, size = 0x2000, scoped, tag = 'input window, operand 0, single buffered']
    #allocation3 [shape = 's32[1]{0}', space=sflag, size = 0x4, scoped, tag = 'scoped memory for resblock_apply.1']
    #allocation4 [shape = 's32[1]{0}', space=sflag, size = 0x4, scoped, tag = 'scoped memory for resblock_apply.1']
    #allocation5 [shape = 'u8[8192]{0}', space=vmem, size = 0x2000, scoped, tag = 'input window, operand 1, single buffered']
    #allocation6 [shape = 's32[1]{0}', space=sflag, size = 0x4, scoped, tag = 'scoped memory for resblock_apply.1']
    #allocation7 [shape = 'u8[8192]{0}', space=vmem, size = 0x2000, scoped, tag = 'output window, operand 0, single buffered']
    %8 = vsyncpa [#allocation3], 0
    %9 = vsyncpa [#allocation6], 0
    %10 = vsyncpa [#allocation4], 0
    // Predicated region
    $region2: #{resblock_apply.1} parent=1 // pred_check
      _
    $region3: #{resblock_apply.1} parent=1 // pred_check_branch
      %12 = sbr.rel (0) target = $region5
    $region4: #{resblock_apply.1} parent=1 // pred_region
      %s14 = ssub.s32 256, 256
      %15 = vsyncadd [#allocation3], %s14
      %s16 = sshll.u32 [#allocation2], 4
      %s17 = int_to_ptr.vmem [resolvable:$true] %s16
      %22 = dma.hbm_to_vmem [thread:$0]  %s0, 256, %s17, [#allocation3], 128, 128, 8
    $region5: #{resblock_apply.1} parent=1 // pred_fallthru
      _
    // Predicated region
    $region6: #{resblock_apply.1} parent=1 // pred_check
      _
    $region7: #{resblock_apply.1} parent=1 // pred_check_branch
      %24 = sbr.rel (0) target = $region9
    $region8: #{resblock_apply.1} parent=1 // pred_region
      %s26 = ssub.s32 256, 256
      %27 = vsyncadd [#allocation6], %s26
      %s28 = sshll.u32 [#allocation5], 4
      %s29 = int_to_ptr.vmem [resolvable:$true] %s28
      %34 = dma.hbm_to_vmem [thread:$0]  %s1, 256, %s29, [#allocation6], 64, 64, 4
    $region9: #{resblock_apply.1} parent=1 // pred_fallthru
      _
    // Predicated region
    $region10: #{resblock_apply.1} parent=1 // pred_check
      _
    $region11: #{resblock_apply.1} parent=1 // pred_check_branch
      %36 = sbr.rel (0) target = $region13
    $region12: #{resblock_apply.1} parent=1 // pred_region
      _
    $region13: #{resblock_apply.1} parent=1 // pred_fallthru
      _
    // Predicated region
    $region14: #{resblock_apply.1} parent=1 // pred_check
      _
    $region15: #{resblock_apply.1} parent=1 // pred_check_branch
      %38 = sbr.rel (0) target = $region17
    $region16: #{resblock_apply.1} parent=1 // pred_region
      %39 = dma.done [#allocation3], 256
    $region17: #{resblock_apply.1} parent=1 // pred_fallthru
      _
    // Predicated region
    $region18: #{resblock_apply.1} parent=1 // pred_check
      _
    $region19: #{resblock_apply.1} parent=1 // pred_check_branch
      %41 = sbr.rel (0) target = $region21
    $region20: #{resblock_apply.1} parent=1 // pred_region
      %42 = dma.done [#allocation6], 256
    $region21: #{resblock_apply.1} parent=1 // pred_fallthru
      _
    %v44 = vld [vmem:[#allocation2] sm:$0xff]
    %v45 = vld [vmem:[#allocation2 + $0x8] sm:$0xff]
    %v46 = vpack.c.bf16 %v45, %v44
    %v47 = vld [vmem:[#allocation5] sm:$0xf]
    %v48 = vld [vmem:[#allocation5 + $0x4] sm:$0xf]
    %v49 = vld [vmem:[#allocation5 + $0x8] sm:$0xf]
    %v50 = vld [vmem:[#allocation5 + $0xc] sm:$0xf]
    %v51 = vld [vmem:[%s2] sm:$0x1]
    %v53 = vlaneseq
    %v54 = vshrl.u32 %v53, 7
    %v55 = vsub.s32 0, %v54
    %v56 = vrot.slane %v51, %v55
    %v62 = vunpack.c.l.b16 %v47
    %v63 = vunpack.c.l.b16 %v48
    %v64 = vunpack.c.l.b16 %v49
    %v65 = vunpack.c.l.b16 %v50
    %v66 = vpack.c.b16 %v63, %v62
    %v67 = vpack.c.b16 %v65, %v64
    %vm70 = vcmask 261120
    %v72 = vsel %vm70, %v46, 0
    %74 = vmatprep.subr.bf16.mxu0 0
    %75 = vmatpush1.bf16.msra.mxu0 %v66
    %76 = vmatprep.subr.bf16.mxu0 0
    %77 = vmatpush1.bf16.msra.mxu0 %v67
    %78 = vmatprep.subr.bf16.mxu0 0
    %79 = vmatpush1.bf16.msra.mxu0 0
    %80 = vmatprep.subr.bf16.mxu0 0
    %81 = vmatpush1.bf16.msra.mxu0 0
    %82 = vmatprep.subr.bf16.mxu0 0
    %83 = vmatpush1.bf16.msra.mxu0 0
    %84 = vmatprep.subr.bf16.mxu0 0
    %85 = vmatpush1.bf16.msra.mxu0 0
    %86 = vmatprep.subr.bf16.mxu0 0
    %87 = vmatpush1.bf16.msra.mxu0 0
    %88 = vmatprep.subr.bf16.mxu0 0
    %89 = vmatpush1.bf16.msra.mxu0 0
    %90 = vmatprep.subr.bf16.mxu0 0
    %91 = vmatpush1.bf16.msra.mxu0 0
    %92 = vmatprep.subr.bf16.mxu0 0
    %93 = vmatpush1.bf16.msra.mxu0 0
    %94 = vmatprep.subr.bf16.mxu0 0
    %95 = vmatpush1.bf16.msra.mxu0 0
    %96 = vmatprep.subr.bf16.mxu0 0
    %97 = vmatpush1.bf16.msra.mxu0 0
    %98 = vmatprep.subr.bf16.mxu0 0
    %99 = vmatpush1.bf16.msra.mxu0 0
    %100 = vmatprep.subr.bf16.mxu0 0
    %101 = vmatpush1.bf16.msra.mxu0 0
    %102 = vmatprep.subr.bf16.mxu0 0
    %103 = vmatpush1.bf16.msra.mxu0 0
    %104 = vmatprep.subr.bf16.mxu0 0
    %105 = vmatpush1.bf16.msra.mxu0 0
    %106 = vmatprep.mubr.bf16.mxu0 0
    %107 = vmatmul.mubr.bf16.gmra.mrb[0].mxu0 %v72
    %v108 = vpop.f32.mrb[0].mxu0
    %v109 = vadd.f32 %v56, %v108
    %v110 = vpop.f32.mrb[0].mxu0
    %v111 = vpop.f32.mrb[0].mxu0
    %v112 = vadd.f32 %v56, %v111
    %v113 = vpop.f32.mrb[0].mxu0
    %114 = vdwg.mxu0
    %v115 = vxor.u32 %v109, 2147483648
    %v116 = vxor.u32 %v112, 2147483648
    %v117 = vmul.f32 %v115, 1.442695
    %v118 = vpow.pop %v117
    %v119 = vmul.f32 %v116, 1.442695
    %v120 = vpow.pop %v119
    %v121 = vadd.f32 %v118, 1.0
    %v122 = vadd.f32 %v120, 1.0
    %v123 = vrcp.pop %v121
    %v124 = vmul.f32 1.0, %v123
    %v125 = vrcp.pop %v122
    %v126 = vmul.f32 1.0, %v125
    %v127 = vmul.f32 %v109, %v124
    %v128 = vmul.f32 %v112, %v126
    %v129 = vadd.f32 %v44, %v127
    %v130 = vadd.f32 %v45, %v128
    %131 = vst.msk [vmem:[#allocation7] sm:$0xff] %vm70, %v129
    %132 = vst.msk [vmem:[#allocation7 + $0x8] sm:$0xff] %vm70, %v130
    // Predicated region
    $region22: #{resblock_apply.1} parent=1 // pred_check
      _
    $region23: #{resblock_apply.1} parent=1 // pred_check_branch
      %134 = sbr.rel (0) target = $region25
    $region24: #{resblock_apply.1} parent=1 // pred_region
      %s136 = ssub.s32 256, 256
      %137 = vsyncadd [#allocation4], %s136
      %s138 = sshll.u32 [#allocation7], 4
      %s139 = int_to_ptr.vmem [resolvable:$true] %s138
      %144 = dma.vmem_to_hbm [thread:$0]  %s139, 256, %s3, [#allocation4], 128, 128, 8
    $region25: #{resblock_apply.1} parent=1 // pred_fallthru
      _
    // Predicated region
    $region26: #{resblock_apply.1} parent=1 // pred_check
      _
    $region27: #{resblock_apply.1} parent=1 // pred_check_branch
      %146 = sbr.rel (0) target = $region29
    $region28: #{resblock_apply.1} parent=1 // pred_region
      %147 = dma.done [#allocation4], 256
    $region29: #{resblock_apply.1} parent=1 // pred_fallthru
      _
    %148 = vsyncpa [#allocation3], 1
    %149 = vsyncpa [#allocation6], 1
    %150 = vsyncpa [#allocation4], 1

</llo_original>
